<compile_context>
chip_gen: v7x
topology: tpu7x:2x2x1
jax: 0.10.0
libtpu: 0.0.40
codegen_flags: <defaults>
</compile_context>

<pallas_src>
import math

import numpy as np

import jax
import jax.numpy as jnp
from jax.experimental import pallas as pl
from jax.experimental.pallas import tpu as pltpu


def _gaussian_1d(kernel_size: int, sigma: float):
    """Normalized 1D Gaussian taps as Python floats (trace-time constants).

    outer(g, g) with g normalized equals the PyTorch module's normalized 2D
    kernel (the 1/(sigma*sqrt(2*pi)) prefactor cancels in the normalization).
    """
    coords = np.arange(kernel_size, dtype=np.float64)
    mean = (kernel_size - 1) / 2.0
    g = np.exp(-0.5 * ((coords - mean) / sigma) ** 2)
    g = g / g.sum()
    return [float(v) for v in g]


def _make_separable_kernel(g, K: int, pad: int, T: int, H: int, W: int):
    """Kernel body: T images of shape (H, W) per grid step.

    x_ref : (T, H, W)      unpadded input tile (VMEM)
    o_ref : (T, H, W)      output tile
    xw_ref: (T, H, W+2p)   scratch: input reflect-padded along W (f32)
    hv_ref: (T, H+2p, W)   scratch: horizontal-pass result reflect-padded along H (f32)
    """

    def kernel(x_ref, o_ref, xw_ref, hv_ref):
        x = x_ref[...].astype(jnp.float32)  # cast once per tile

        # ---- reflect-pad along W (lane axis) into scratch ----
        xw_ref[:, :, pad:pad + W] = x
        for i in range(pad):
            # left:  padded col i        <- x col (pad - i)
            xw_ref[:, :, i:i + 1] = x[:, :, pad - i:pad - i + 1]
            # right: padded col pad+W+i  <- x col (W - 2 - i)
            xw_ref[:, :, pad + W + i:pad + W + i + 1] = x[:, :, W - 2 - i:W - 1 - i]
        xw = xw_ref[...]

        # ---- horizontal 1D Gaussian pass (K taps along W) ----
        h = g[0] * xw[:, :, 0:W]
        for v in range(1, K):
            h = h + g[v] * xw[:, :, v:v + W]

        # ---- reflect-pad along H (sublane axis) into scratch ----
        hv_ref[:, pad:pad + H, :] = h
        for i in range(pad):
            hv_ref[:, i:i + 1, :] = h[:, pad - i:pad - i + 1, :]
            hv_ref[:, pad + H + i:pad + H + i + 1, :] = h[:, H - 2 - i:H - 1 - i, :]
        hv = hv_ref[...]

        # ---- vertical 1D Gaussian pass (K taps along H) ----
        acc = g[0] * hv[:, 0:H, :]
        for u in range(1, K):
            acc = acc + g[u] * hv[:, u:u + H, :]

        o_ref[...] = acc.astype(o_ref.dtype)

    return kernel


def _choose_bc_tile(BC: int, H: int, W: int, pad: int, budget_bytes: int = 8 << 20):
    """How many (b, c) images to process per grid step.

    Big enough to amortize the ~0.35us per-step overhead, small enough to fit
    comfortably under v7x's 32 MiB scoped-VMEM default, and leaving >= 2 grid
    steps (when BC >= 2) so both v7x TensorCores get work.
    """
    Hp, Wp = H + 2 * pad, W + 2 * pad
    # in block (double-buffered) + out block (double-buffered) + 2 scratches
    # + a couple of live temporaries, all f32.
    per_img_bytes = 4 * (6 * H * W + H * Wp + Hp * W)
    max_tile = max(1, budget_bytes // per_img_bytes)
    if BC >= 2:
        max_tile = min(max_tile, max(1, BC // 2))
    best = 1
    for d in range(1, BC + 1):
        if BC % d == 0 and d <= max_tile:
            best = d
    return best


def gaussian_smoothing(x: jnp.ndarray, channels: int, kernel_size: int, sigma: float):
    """Pallas equivalent of GaussianSmoothing(channels, kernel_size, sigma, dim=2)(x)."""
    B, C, H, W = x.shape
    assert C == channels, "channel mismatch"
    assert kernel_size % 2 == 1, "only odd kernel_size preserves the spatial shape"
    pad = kernel_size // 2
    assert pad < H and pad < W, "reflect padding requires kernel_size//2 < H and < W"

    g = _gaussian_1d(kernel_size, sigma)

    BC = B * C
    x2 = x.reshape(BC, H, W)  # free (contiguous) reshape, no transpose / HBM copy

    T = _choose_bc_tile(BC, H, W, pad)
    grid = (BC // T,)
    Hp, Wp = H + 2 * pad, W + 2 * pad

    kern = _make_separable_kernel(g, kernel_size, pad, T, H, W)

    out = pl.pallas_call(
        kern,
        out_shape=jax.ShapeDtypeStruct((BC, H, W), x.dtype),
        grid_spec=pltpu.PrefetchScalarGridSpec(
            num_scalar_prefetch=0,
            grid=grid,
            in_specs=[pl.BlockSpec((T, H, W), lambda i: (i, 0, 0))],
            out_specs=pl.BlockSpec((T, H, W), lambda i: (i, 0, 0)),
            scratch_shapes=[
                pltpu.VMEM((T, H, Wp), jnp.float32),
                pltpu.VMEM((T, Hp, W), jnp.float32),
            ],
        ),
        compiler_params=pltpu.CompilerParams(
            dimension_semantics=("parallel",),
            vmem_limit_bytes=64 << 20,
        ),
    )(x2)
    return out.reshape(B, C, H, W)


def _reference(x, channels, kernel_size, sigma):
    """Pure-JAX reference: depthwise conv via lax.conv (mirrors F.conv2d groups=C)."""
    pad = kernel_size // 2
    g = jnp.asarray(_gaussian_1d(kernel_size, sigma), dtype=jnp.float32)
    k2d = g[:, None] * g[None, :]
    w = jnp.broadcast_to(k2d, (channels, 1, kernel_size, kernel_size))
    xpad = jnp.pad(x, ((0, 0), (0, 0), (pad, pad), (pad, pad)), mode="reflect")
    return jax.lax.conv_general_dilated(
        xpad,
        w,
        window_strides=(1, 1),
        padding="VALID",
        dimension_numbers=("NCHW", "OIHW", "NCHW"),
        feature_group_count=channels,
    )


if __name__ == "__main__":
    B, C, H, W = 2, 4, 16, 16
    kernel_size = 5
    sigma = 1.5

    key = jax.random.PRNGKey(0)
    x = jax.random.normal(key, (B, C, H, W), dtype=jnp.float32)

    out = gaussian_smoothing(x, C, kernel_size, sigma)
    out = jax.block_until_ready(out)

    ref = jax.block_until_ready(_reference(x, C, kernel_size, sigma))
    assert out.shape == (B, C, H, W)
    assert jnp.allclose(out, ref, atol=1e-5, rtol=1e-5), "mismatch vs reference conv"

    print("KERNEL_OK")
</pallas_src>

<mosaic_0001>
module attributes {stable_mosaic.version = 11 : i64} {
  func.func @kernel(%arg0: i32, %arg1: memref<4x16x16xf32, #tpu.memory_space<vmem>>, %arg2: memref<4x16x16xf32, #tpu.memory_space<vmem>>, %arg3: memref<4x16x20xf32, #tpu.memory_space<vmem>>, %arg4: memref<4x20x16xf32, #tpu.memory_space<vmem>>) attributes {dimension_semantics = [#tpu.dimension_semantics<parallel>], iteration_bounds = array<i64: 2>, scalar_prefetch = 0 : i64, scratch_operands = 2 : i64, tpu.core_type = #tpu.core_type<tc>, window_params = [{transform_indices = @transform_0, window_bounds = array<i64: 4, 16, 16>}, {transform_indices = @transform_1, window_bounds = array<i64: 4, 16, 16>}]} {
    %c0 = arith.constant 0 : index
    %c0_0 = arith.constant 0 : index
    %c0_1 = arith.constant 0 : index
    %0 = vector.load %arg1[%c0, %c0_0, %c0_1] : memref<4x16x16xf32, #tpu.memory_space<vmem>>, vector<4x16x16xf32>
    %c0_2 = arith.constant 0 : index
    %c0_3 = arith.constant 0 : index
    %c2 = arith.constant 2 : index
    %1 = vector.load %arg3[%c0_2, %c0_3, %c2] : memref<4x16x20xf32, #tpu.memory_space<vmem>>, vector<4x16x16xf32>
    tpu.vector_store %arg3[%c0_2, %c0_3, %c2], %0 {strides = array<i32>} : memref<4x16x20xf32, #tpu.memory_space<vmem>>, vector<4x16x16xf32>,
    %2 = vector.extract_strided_slice %0 {offsets = [0, 0, 2], sizes = [4, 16, 1], strides = [1, 1, 1]} : vector<4x16x16xf32> to vector<4x16x1xf32>
    %c0_4 = arith.constant 0 : index
    %c0_5 = arith.constant 0 : index
    %c0_6 = arith.constant 0 : index
    %3 = vector.load %arg3[%c0_4, %c0_5, %c0_6] : memref<4x16x20xf32, #tpu.memory_space<vmem>>, vector<4x16x1xf32>
    tpu.vector_store %arg3[%c0_4, %c0_5, %c0_6], %2 {strides = array<i32>} : memref<4x16x20xf32, #tpu.memory_space<vmem>>, vector<4x16x1xf32>,
    %4 = vector.extract_strided_slice %0 {offsets = [0, 0, 14], sizes = [4, 16, 1], strides = [1, 1, 1]} : vector<4x16x16xf32> to vector<4x16x1xf32>
    %c0_7 = arith.constant 0 : index
    %c0_8 = arith.constant 0 : index
    %c18 = arith.constant 18 : index
    %5 = vector.load %arg3[%c0_7, %c0_8, %c18] : memref<4x16x20xf32, #tpu.memory_space<vmem>>, vector<4x16x1xf32>
    tpu.vector_store %arg3[%c0_7, %c0_8, %c18], %4 {strides = array<i32>} : memref<4x16x20xf32, #tpu.memory_space<vmem>>, vector<4x16x1xf32>,
    %6 = vector.extract_strided_slice %0 {offsets = [0, 0, 1], sizes = [4, 16, 1], strides = [1, 1, 1]} : vector<4x16x16xf32> to vector<4x16x1xf32>
    %c0_9 = arith.constant 0 : index
    %c0_10 = arith.constant 0 : index
    %c1 = arith.constant 1 : index
    %7 = vector.load %arg3[%c0_9, %c0_10, %c1] : memref<4x16x20xf32, #tpu.memory_space<vmem>>, vector<4x16x1xf32>
    tpu.vector_store %arg3[%c0_9, %c0_10, %c1], %6 {strides = array<i32>} : memref<4x16x20xf32, #tpu.memory_space<vmem>>, vector<4x16x1xf32>,
    %8 = vector.extract_strided_slice %0 {offsets = [0, 0, 13], sizes = [4, 16, 1], strides = [1, 1, 1]} : vector<4x16x16xf32> to vector<4x16x1xf32>
    %c0_11 = arith.constant 0 : index
    %c0_12 = arith.constant 0 : index
    %c19 = arith.constant 19 : index
    %9 = vector.load %arg3[%c0_11, %c0_12, %c19] : memref<4x16x20xf32, #tpu.memory_space<vmem>>, vector<4x16x1xf32>
    tpu.vector_store %arg3[%c0_11, %c0_12, %c19], %8 {strides = array<i32>} : memref<4x16x20xf32, #tpu.memory_space<vmem>>, vector<4x16x1xf32>,
    %c0_13 = arith.constant 0 : index
    %c0_14 = arith.constant 0 : index
    %c0_15 = arith.constant 0 : index
    %10 = vector.load %arg3[%c0_13, %c0_14, %c0_15] : memref<4x16x20xf32, #tpu.memory_space<vmem>>, vector<4x16x20xf32>
    %11 = vector.extract_strided_slice %10 {offsets = [0, 0, 0], sizes = [4, 16, 16], strides = [1, 1, 1]} : vector<4x16x20xf32> to vector<4x16x16xf32>
    %cst = arith.constant 0.120078385 : f32
    %12 = vector.broadcast %cst : f32 to vector<4x16x16xf32>
    %13 = arith.mulf %12, %11 : vector<4x16x16xf32>
    %14 = vector.extract_strided_slice %10 {offsets = [0, 0, 1], sizes = [4, 16, 16], strides = [1, 1, 1]} : vector<4x16x20xf32> to vector<4x16x16xf32>
    %cst_16 = arith.constant 0.233880758 : f32
    %15 = vector.broadcast %cst_16 : f32 to vector<4x16x16xf32>
    %16 = arith.mulf %15, %14 : vector<4x16x16xf32>
    %17 = arith.addf %13, %16 : vector<4x16x16xf32>
    %18 = vector.extract_strided_slice %10 {offsets = [0, 0, 2], sizes = [4, 16, 16], strides = [1, 1, 1]} : vector<4x16x20xf32> to vector<4x16x16xf32>
    %cst_17 = arith.constant 0.292081714 : f32
    %19 = vector.broadcast %cst_17 : f32 to vector<4x16x16xf32>
    %20 = arith.mulf %19, %18 : vector<4x16x16xf32>
    %21 = arith.addf %17, %20 : vector<4x16x16xf32>
    %22 = vector.extract_strided_slice %10 {offsets = [0, 0, 3], sizes = [4, 16, 16], strides = [1, 1, 1]} : vector<4x16x20xf32> to vector<4x16x16xf32>
    %cst_18 = arith.constant 0.233880758 : f32
    %23 = vector.broadcast %cst_18 : f32 to vector<4x16x16xf32>
    %24 = arith.mulf %23, %22 : vector<4x16x16xf32>
    %25 = arith.addf %21, %24 : vector<4x16x16xf32>
    %26 = vector.extract_strided_slice %10 {offsets = [0, 0, 4], sizes = [4, 16, 16], strides = [1, 1, 1]} : vector<4x16x20xf32> to vector<4x16x16xf32>
    %cst_19 = arith.constant 0.120078385 : f32
    %27 = vector.broadcast %cst_19 : f32 to vector<4x16x16xf32>
    %28 = arith.mulf %27, %26 : vector<4x16x16xf32>
    %29 = arith.addf %25, %28 : vector<4x16x16xf32>
    %c0_20 = arith.constant 0 : index
    %c2_21 = arith.constant 2 : index
    %c0_22 = arith.constant 0 : index
    %30 = vector.load %arg4[%c0_20, %c2_21, %c0_22] : memref<4x20x16xf32, #tpu.memory_space<vmem>>, vector<4x16x16xf32>
    tpu.vector_store %arg4[%c0_20, %c2_21, %c0_22], %29 {strides = array<i32>} : memref<4x20x16xf32, #tpu.memory_space<vmem>>, vector<4x16x16xf32>,
    %31 = vector.extract_strided_slice %29 {offsets = [0, 2, 0], sizes = [4, 1, 16], strides = [1, 1, 1]} : vector<4x16x16xf32> to vector<4x1x16xf32>
    %c0_23 = arith.constant 0 : index
    %c0_24 = arith.constant 0 : index
    %c0_25 = arith.constant 0 : index
    %32 = vector.load %arg4[%c0_23, %c0_24, %c0_25] : memref<4x20x16xf32, #tpu.memory_space<vmem>>, vector<4x1x16xf32>
    tpu.vector_store %arg4[%c0_23, %c0_24, %c0_25], %31 {strides = array<i32>} : memref<4x20x16xf32, #tpu.memory_space<vmem>>, vector<4x1x16xf32>,
    %33 = vector.extract_strided_slice %29 {offsets = [0, 14, 0], sizes = [4, 1, 16], strides = [1, 1, 1]} : vector<4x16x16xf32> to vector<4x1x16xf32>
    %c0_26 = arith.constant 0 : index
    %c18_27 = arith.constant 18 : index
    %c0_28 = arith.constant 0 : index
    %34 = vector.load %arg4[%c0_26, %c18_27, %c0_28] : memref<4x20x16xf32, #tpu.memory_space<vmem>>, vector<4x1x16xf32>
    tpu.vector_store %arg4[%c0_26, %c18_27, %c0_28], %33 {strides = array<i32>} : memref<4x20x16xf32, #tpu.memory_space<vmem>>, vector<4x1x16xf32>,
    %35 = vector.extract_strided_slice %29 {offsets = [0, 1, 0], sizes = [4, 1, 16], strides = [1, 1, 1]} : vector<4x16x16xf32> to vector<4x1x16xf32>
    %c0_29 = arith.constant 0 : index
    %c1_30 = arith.constant 1 : index
    %c0_31 = arith.constant 0 : index
    %36 = vector.load %arg4[%c0_29, %c1_30, %c0_31] : memref<4x20x16xf32, #tpu.memory_space<vmem>>, vector<4x1x16xf32>
    tpu.vector_store %arg4[%c0_29, %c1_30, %c0_31], %35 {strides = array<i32>} : memref<4x20x16xf32, #tpu.memory_space<vmem>>, vector<4x1x16xf32>,
    %37 = vector.extract_strided_slice %29 {offsets = [0, 13, 0], sizes = [4, 1, 16], strides = [1, 1, 1]} : vector<4x16x16xf32> to vector<4x1x16xf32>
    %c0_32 = arith.constant 0 : index
    %c19_33 = arith.constant 19 : index
    %c0_34 = arith.constant 0 : index
    %38 = vector.load %arg4[%c0_32, %c19_33, %c0_34] : memref<4x20x16xf32, #tpu.memory_space<vmem>>, vector<4x1x16xf32>
    tpu.vector_store %arg4[%c0_32, %c19_33, %c0_34], %37 {strides = array<i32>} : memref<4x20x16xf32, #tpu.memory_space<vmem>>, vector<4x1x16xf32>,
    %c0_35 = arith.constant 0 : index
    %c0_36 = arith.constant 0 : index
    %c0_37 = arith.constant 0 : index
    %39 = vector.load %arg4[%c0_35, %c0_36, %c0_37] : memref<4x20x16xf32, #tpu.memory_space<vmem>>, vector<4x20x16xf32>
    %40 = vector.extract_strided_slice %39 {offsets = [0, 0, 0], sizes = [4, 16, 16], strides = [1, 1, 1]} : vector<4x20x16xf32> to vector<4x16x16xf32>
    %cst_38 = arith.constant 0.120078385 : f32
    %41 = vector.broadcast %cst_38 : f32 to vector<4x16x16xf32>
    %42 = arith.mulf %41, %40 : vector<4x16x16xf32>
    %43 = vector.extract_strided_slice %39 {offsets = [0, 1, 0], sizes = [4, 16, 16], strides = [1, 1, 1]} : vector<4x20x16xf32> to vector<4x16x16xf32>
    %cst_39 = arith.constant 0.233880758 : f32
    %44 = vector.broadcast %cst_39 : f32 to vector<4x16x16xf32>
    %45 = arith.mulf %44, %43 : vector<4x16x16xf32>
    %46 = arith.addf %42, %45 : vector<4x16x16xf32>
    %47 = vector.extract_strided_slice %39 {offsets = [0, 2, 0], sizes = [4, 16, 16], strides = [1, 1, 1]} : vector<4x20x16xf32> to vector<4x16x16xf32>
    %cst_40 = arith.constant 0.292081714 : f32
    %48 = vector.broadcast %cst_40 : f32 to vector<4x16x16xf32>
    %49 = arith.mulf %48, %47 : vector<4x16x16xf32>
    %50 = arith.addf %46, %49 : vector<4x16x16xf32>
    %51 = vector.extract_strided_slice %39 {offsets = [0, 3, 0], sizes = [4, 16, 16], strides = [1, 1, 1]} : vector<4x20x16xf32> to vector<4x16x16xf32>
    %cst_41 = arith.constant 0.233880758 : f32
    %52 = vector.broadcast %cst_41 : f32 to vector<4x16x16xf32>
    %53 = arith.mulf %52, %51 : vector<4x16x16xf32>
    %54 = arith.addf %50, %53 : vector<4x16x16xf32>
    %55 = vector.extract_strided_slice %39 {offsets = [0, 4, 0], sizes = [4, 16, 16], strides = [1, 1, 1]} : vector<4x20x16xf32> to vector<4x16x16xf32>
    %cst_42 = arith.constant 0.120078385 : f32
    %56 = vector.broadcast %cst_42 : f32 to vector<4x16x16xf32>
    %57 = arith.mulf %56, %55 : vector<4x16x16xf32>
    %58 = arith.addf %54, %57 : vector<4x16x16xf32>
    %c0_43 = arith.constant 0 : index
    %c0_44 = arith.constant 0 : index
    %c0_45 = arith.constant 0 : index
    %59 = vector.load %arg2[%c0_43, %c0_44, %c0_45] : memref<4x16x16xf32, #tpu.memory_space<vmem>>, vector<4x16x16xf32>
    tpu.vector_store %arg2[%c0_43, %c0_44, %c0_45], %58 {strides = array<i32>} : memref<4x16x16xf32, #tpu.memory_space<vmem>>, vector<4x16x16xf32>,
    return
  }
  func.func @transform_0(%arg0: i32) -> (i32, i32, i32) {
    %c0_i32 = arith.constant 0 : i32
    %c0_i32_0 = arith.constant 0 : i32
    %c0_i32_1 = arith.constant 0 : i32
    return %arg0, %c0_i32, %c0_i32_0 : i32, i32, i32
  }
  func.func @transform_1(%arg0: i32) -> (i32, i32, i32) {
    %c0_i32 = arith.constant 0 : i32
    %c0_i32_0 = arith.constant 0 : i32
    %c0_i32_1 = arith.constant 0 : i32
    return %arg0, %c0_i32, %c0_i32_0 : i32, i32, i32
  }
}

</mosaic_0001>

<llo_original>
// kernel: tpu_custom_call.1
$region0: #{tpu_custom_call.1}
  #allocation0 [shape = 'u32[]', space=smem, size = 0x4, offset = 0x4, fixed_abs, tag = 'smem constant byte address 0x4 - core index']
  #allocation1 [shape = 'u32[144,128]{1,0:T(1,128)}', space=vmem, size = 0x12000, scoped, tag = 'internal scratch']
  #allocation2 [shape = 'f32[4,16,20]{2,1,0:T(8,128)}', space=vmem, size = 0x8000, scoped, tag = 'scratch operand']
  #allocation3 [shape = 'f32[4,20,16]{2,1,0:T(8,128)}', space=vmem, size = 0xc000, scoped, tag = 'scratch operand']
  %s0 = inlined_call_operand.hbm [shape: f32[8,16,16], index: 0, kind: input, shape index: {}]
  %s1 = inlined_call_operand.hbm [shape: f32[8,16,16], index: 1, kind: output, shape index: {}]
  %s2 = sld [smem:[#allocation0]]
  $region41: #{tpu_custom_call.1} parent=0
    _
  %s4 = ssub.s32 1, %s2
  %s5 = scalar_select 0, %s4, %s2
  $region1: #{tpu_custom_call.1} parent=0
    #allocation4 [shape = 'u8[65536]{0}', space=vmem, size = 0x10000, scoped, tag = 'input window, operand 0']
    #allocation5 [shape = 's32[2]{0}', space=sflag, size = 0x8, scoped, tag = 'scoped memory for tpu_custom_call.1']
    #allocation6 [shape = 's32[2]{0}', space=sflag, size = 0x8, scoped, tag = 'scoped memory for tpu_custom_call.1']
    #allocation7 [shape = 'u8[65536]{0}', space=vmem, size = 0x10000, scoped, tag = 'output window, operand 0']
    %6 = vsyncpa [#allocation5], 0
    %s7 = scalar_lea.sflag [#allocation5], 1
    %8 = vsyncpa %s7, 0
    %9 = vsyncpa [#allocation6], 0
    %s10 = scalar_lea.sflag [#allocation6], 1
    %11 = vsyncpa %s10, 0
    loop: start=0, step=1, limit=4
    $region2: #{tpu_custom_call.1} parent=1 // loop_pre_header
      _
    $region3: #{tpu_custom_call.1} parent=1 // loop_header
      %s13 = sphi 0, %s17
      %p14 = scmp.ge.s32.totalorder %s13, 4
      %s23 = sphi 0, %s25
      %s26 = sphi 0, %s23
      %s27 = sphi 0, %s26
      %s43 = sphi 0, %s27
      %s49 = sphi 0, %s51
      %s52 = sphi 0, %s49
      %s53 = sphi 0, %s52
      %s69 = sphi 0, %s53
    $region4: #{tpu_custom_call.1} parent=1 // loop_header_branch
      %16 = sbr.rel (%p14) target = $region8
    $region5: #{tpu_custom_call.1} parent=1 // loop_body
      %s18 = ssub.s32 %s13, 1
      %s19 = ssub.s32 %s13, 2
      %s20 = sadd.s32 %s13, 1
      %s21 = ssub.s32 %s13, %s20
      %p22 = scmp.eq.s32.totalorder %s21, 0
      %s24 = sadd.s32 %s23, 1
      %s25 = scalar_select %p22, %s23, %s24
      %p28 = pneg %p22
      %p29 = scmp.eq.s32.totalorder %s13, 1
      %p30 = por %p28, %p29
      %p31 = scmp.ne.s32.totalorder %s23, %s26
      %p32 = scmp.eq.s32.totalorder %s13, 0
      %p33 = por %p31, %p32
      %p34 = scmp.ne.s32.totalorder %s23, %s26
      %p35 = scmp.eq.s32.totalorder %s18, 1
      %p36 = por %p34, %p35
      %p37 = scmp.ne.s32.totalorder %s26, %s27
      %p38 = scmp.eq.s32.totalorder %s18, 0
      %p39 = por %p37, %p38
      %p40 = scmp.ne.s32.totalorder %s26, %s27
      %p41 = scmp.eq.s32.totalorder %s19, 1
      %p42 = por %p40, %p41
      %p44 = scmp.ne.s32.totalorder %s27, %s43
      %p45 = scmp.eq.s32.totalorder %s19, 0
      %p46 = por %p44, %p45
      %s47 = ssub.s32 %s13, %s20
      %p48 = scmp.eq.s32.totalorder %s47, 0
      %s50 = sadd.s32 %s49, 1
      %s51 = scalar_select %p48, %s49, %s50
      %p54 = pneg %p48
      %p55 = scmp.eq.s32.totalorder %s13, 1
      %p56 = por %p54, %p55
      %p57 = scmp.ne.s32.totalorder %s49, %s52
      %p58 = scmp.eq.s32.totalorder %s13, 0
      %p59 = por %p57, %p58
      %p60 = scmp.ne.s32.totalorder %s49, %s52
      %p61 = scmp.eq.s32.totalorder %s18, 1
      %p62 = por %p60, %p61
      %p63 = scmp.ne.s32.totalorder %s52, %s53
      %p64 = scmp.eq.s32.totalorder %s18, 0
      %p65 = por %p63, %p64
      %p66 = scmp.ne.s32.totalorder %s52, %s53
      %p67 = scmp.eq.s32.totalorder %s19, 1
      %p68 = por %p66, %p67
      %p70 = scmp.ne.s32.totalorder %s53, %s69
      %p71 = scmp.eq.s32.totalorder %s19, 0
      %p72 = por %p70, %p71
      %p73 = scmp.le.s32.totalorder 1, %s13
      %p74 = scmp.lt.s32.totalorder %s13, 3
      %p75 = pnand %p73, %p74
      %p76 = pneg %p75
      // Predicated region
      $region9: #{tpu_custom_call.1} parent=5 // pred_check
        _
      $region10: #{tpu_custom_call.1} parent=5 // pred_check_branch
        %78 = sbr.rel (%p75) target = $region12
      $region11: #{tpu_custom_call.1} parent=5 // pred_region
        %s79 = ssub.s32 %s13, 1
      $region12: #{tpu_custom_call.1} parent=5 // pred_fallthru
        _
      %p80 = scmp.lt.s32.totalorder %s13, 2
      // Predicated region
      $region13: #{tpu_custom_call.1} parent=5 // pred_check
        %p81 = pneg %p80
      $region14: #{tpu_custom_call.1} parent=5 // pred_check_branch
        %83 = sbr.rel (%p81) target = $region16
      $region15: #{tpu_custom_call.1} parent=5 // pred_region
        // Predicated region
        $region17: #{tpu_custom_call.1} parent=15 // pred_check
          %p84 = pneg %p33
        $region18: #{tpu_custom_call.1} parent=15 // pred_check_branch
          %86 = sbr.rel (%p84) target = $region20
        $region19: #{tpu_custom_call.1} parent=15 // pred_region
          %s87 = sand.u32 %s23, 1
          %s88 = scalar_lea.sflag [#allocation5], %s87
          %s89 = sand.u32 %s23, 1
          %s90 = smul.addr %s89, 64
          %s91 = scalar_lea.vmem [#allocation4], %s90
          %s92 = smul.u32 4, %s13
          %s94 = ssub.s32 1024, 1024
          %95 = vsyncadd %s88, %s94
          %s96 = smul.addr %s92, 2
          %s97 = smul.addr %s96, 128
          %s98 = scalar_lea.hbm %s0, %s97
          %s99 = sshll.u32 %s91, 4
          %s100 = int_to_ptr.vmem [resolvable:$true] %s99
          %105 = dma.hbm_to_vmem [thread:$0]  %s98, 1024, %s100, %s88, 128, 128, 8
        $region20: #{tpu_custom_call.1} parent=15 // pred_fallthru
          _
      $region16: #{tpu_custom_call.1} parent=5 // pred_fallthru
        _
      %p106 = scmp.le.s32.totalorder 1, %s13
      %p107 = scmp.lt.s32.totalorder %s13, 3
      %p108 = pnand %p106, %p107
      %p109 = pneg %p108
      // Predicated region
      $region21: #{tpu_custom_call.1} parent=5 // pred_check
        _
      $region22: #{tpu_custom_call.1} parent=5 // pred_check_branch
        %111 = sbr.rel (%p108) target = $region24
      $region23: #{tpu_custom_call.1} parent=5 // pred_region
        %s112 = ssub.s32 %s13, 1
        %s113 = sand.u32 %s26, 1
        %s114 = scalar_lea.sflag [#allocation5], %s113
        %s115 = sand.u32 %s26, 1
        %s116 = smul.addr %s115, 64
        %s117 = scalar_lea.vmem [#allocation4], %s116
        // Predicated region
        $region25: #{tpu_custom_call.1} parent=23 // pred_check
          %p118 = pneg %p39
        $region26: #{tpu_custom_call.1} parent=23 // pred_check_branch
          %120 = sbr.rel (%p118) target = $region28
        $region27: #{tpu_custom_call.1} parent=23 // pred_region
          %121 = dma.done %s114, 1024
        $region28: #{tpu_custom_call.1} parent=23 // pred_fallthru
          _
        %s122 = sand.u32 %s26, 1
        %s123 = scalar_lea.sflag [#allocation5], %s122
        %s124 = sand.u32 %s26, 1
        %s125 = smul.addr %s124, 64
        %s126 = scalar_lea.vmem [#allocation4], %s125
        %p127 = pneg %p39
        %p128 = pneg %p36
        %p129 = pneg %p65
        %p130 = pneg %p62
        %s131 = sand.u32 %s52, 1
        %s132 = scalar_lea.sflag [#allocation6], %s131
        %s133 = sand.u32 %s52, 1
        %s134 = smul.addr %s133, 64
        %s135 = scalar_lea.vmem [#allocation7], %s134
        %s136 = smul.u32 4, %s18
        %s137 = smul.u32 4, %s18
        %v138 = vld [vmem:[%s117] sm:$0xff]
        %v139 = vld [vmem:[%s117 + $0x8] sm:$0xff]
        %v140 = vld [vmem:[%s117 + $0x10] sm:$0xff]
        %v141 = vld [vmem:[%s117 + $0x18] sm:$0xff]
        %v142 = vld [vmem:[%s117 + $0x20] sm:$0xff]
        %v143 = vld [vmem:[%s117 + $0x28] sm:$0xff]
        %v144 = vld [vmem:[%s117 + $0x30] sm:$0xff]
        %v145 = vld [vmem:[%s117 + $0x38] sm:$0xff]
        %154 = vrot.lane.b32.xlu0 %v138, 2
        %v155 = vpop.permute.xlu0 %154
        %156 = vrot.lane.b32.xlu0 %v139, 2
        %v157 = vpop.permute.xlu0 %156
        %158 = vrot.lane.b32.xlu0 %v140, 2
        %v159 = vpop.permute.xlu0 %158
        %160 = vrot.lane.b32.xlu0 %v141, 2
        %v161 = vpop.permute.xlu0 %160
        %162 = vrot.lane.b32.xlu0 %v142, 2
        %v163 = vpop.permute.xlu0 %162
        %164 = vrot.lane.b32.xlu0 %v143, 2
        %v165 = vpop.permute.xlu0 %164
        %166 = vrot.lane.b32.xlu0 %v144, 2
        %v167 = vpop.permute.xlu0 %166
        %168 = vrot.lane.b32.xlu0 %v145, 2
        %v169 = vpop.permute.xlu0 %168
        %vm178 = vcmask 146448
        %179 = vst.msk [vmem:[#allocation2] sm:$0xff] %vm178, %v155
        %180 = vst.msk [vmem:[#allocation2 + $0x8] sm:$0xff] %vm178, %v157
        %181 = vst.msk [vmem:[#allocation2 + $0x10] sm:$0xff] %vm178, %v159
        %182 = vst.msk [vmem:[#allocation2 + $0x18] sm:$0xff] %vm178, %v161
        %183 = vst.msk [vmem:[#allocation2 + $0x20] sm:$0xff] %vm178, %v163
        %184 = vst.msk [vmem:[#allocation2 + $0x28] sm:$0xff] %vm178, %v165
        %185 = vst.msk [vmem:[#allocation2 + $0x30] sm:$0xff] %vm178, %v167
        %186 = vst.msk [vmem:[#allocation2 + $0x38] sm:$0xff] %vm178, %v169
        %187 = vrot.lane.b32.xlu0 %v138, 126
        %v188 = vpop.permute.xlu0 %187
        %189 = vrot.lane.b32.xlu0 %v139, 126
        %v190 = vpop.permute.xlu0 %189
        %191 = vrot.lane.b32.xlu0 %v140, 126
        %v192 = vpop.permute.xlu0 %191
        %193 = vrot.lane.b32.xlu0 %v141, 126
        %v194 = vpop.permute.xlu0 %193
        %195 = vrot.lane.b32.xlu0 %v142, 126
        %v196 = vpop.permute.xlu0 %195
        %197 = vrot.lane.b32.xlu0 %v143, 126
        %v198 = vpop.permute.xlu0 %197
        %199 = vrot.lane.b32.xlu0 %v144, 126
        %v200 = vpop.permute.xlu0 %199
        %201 = vrot.lane.b32.xlu0 %v145, 126
        %v202 = vpop.permute.xlu0 %201
        %vm211 = vcmask 7168
        %212 = vst.msk [vmem:[#allocation2] sm:$0xff] %vm211, %v188
        %213 = vst.msk [vmem:[#allocation2 + $0x8] sm:$0xff] %vm211, %v190
        %214 = vst.msk [vmem:[#allocation2 + $0x10] sm:$0xff] %vm211, %v192
        %215 = vst.msk [vmem:[#allocation2 + $0x18] sm:$0xff] %vm211, %v194
        %216 = vst.msk [vmem:[#allocation2 + $0x20] sm:$0xff] %vm211, %v196
        %217 = vst.msk [vmem:[#allocation2 + $0x28] sm:$0xff] %vm211, %v198
        %218 = vst.msk [vmem:[#allocation2 + $0x30] sm:$0xff] %vm211, %v200
        %219 = vst.msk [vmem:[#allocation2 + $0x38] sm:$0xff] %vm211, %v202
        %220 = vrot.lane.b32.xlu0 %v138, 4
        %v221 = vpop.permute.xlu0 %220
        %222 = vrot.lane.b32.xlu0 %v139, 4
        %v223 = vpop.permute.xlu0 %222
        %224 = vrot.lane.b32.xlu0 %v140, 4
        %v225 = vpop.permute.xlu0 %224
        %226 = vrot.lane.b32.xlu0 %v141, 4
        %v227 = vpop.permute.xlu0 %226
        %228 = vrot.lane.b32.xlu0 %v142, 4
        %v229 = vpop.permute.xlu0 %228
        %230 = vrot.lane.b32.xlu0 %v143, 4
        %v231 = vpop.permute.xlu0 %230
        %232 = vrot.lane.b32.xlu0 %v144, 4
        %v233 = vpop.permute.xlu0 %232
        %234 = vrot.lane.b32.xlu0 %v145, 4
        %v235 = vpop.permute.xlu0 %234
        %vm244 = vcmask 154768
        %245 = vst.msk [vmem:[#allocation2] sm:$0xff] %vm244, %v221
        %246 = vst.msk [vmem:[#allocation2 + $0x8] sm:$0xff] %vm244, %v223
        %247 = vst.msk [vmem:[#allocation2 + $0x10] sm:$0xff] %vm244, %v225
        %248 = vst.msk [vmem:[#allocation2 + $0x18] sm:$0xff] %vm244, %v227
        %249 = vst.msk [vmem:[#allocation2 + $0x20] sm:$0xff] %vm244, %v229
        %250 = vst.msk [vmem:[#allocation2 + $0x28] sm:$0xff] %vm244, %v231
        %251 = vst.msk [vmem:[#allocation2 + $0x30] sm:$0xff] %vm244, %v233
        %252 = vst.msk [vmem:[#allocation2 + $0x38] sm:$0xff] %vm244, %v235
        %vm253 = vcmask 15368
        %254 = vst.msk [vmem:[#allocation2] sm:$0xff] %vm253, %v138
        %255 = vst.msk [vmem:[#allocation2 + $0x8] sm:$0xff] %vm253, %v139
        %256 = vst.msk [vmem:[#allocation2 + $0x10] sm:$0xff] %vm253, %v140
        %257 = vst.msk [vmem:[#allocation2 + $0x18] sm:$0xff] %vm253, %v141
        %258 = vst.msk [vmem:[#allocation2 + $0x20] sm:$0xff] %vm253, %v142
        %259 = vst.msk [vmem:[#allocation2 + $0x28] sm:$0xff] %vm253, %v143
        %260 = vst.msk [vmem:[#allocation2 + $0x30] sm:$0xff] %vm253, %v144
        %261 = vst.msk [vmem:[#allocation2 + $0x38] sm:$0xff] %vm253, %v145
        %262 = vrot.lane.b32.xlu0 %v138, 6
        %v263 = vpop.permute.xlu0 %262
        %264 = vrot.lane.b32.xlu0 %v139, 6
        %v265 = vpop.permute.xlu0 %264
        %266 = vrot.lane.b32.xlu0 %v140, 6
        %v267 = vpop.permute.xlu0 %266
        %268 = vrot.lane.b32.xlu0 %v141, 6
        %v269 = vpop.permute.xlu0 %268
        %270 = vrot.lane.b32.xlu0 %v142, 6
        %v271 = vpop.permute.xlu0 %270
        %272 = vrot.lane.b32.xlu0 %v143, 6
        %v273 = vpop.permute.xlu0 %272
        %274 = vrot.lane.b32.xlu0 %v144, 6
        %v275 = vpop.permute.xlu0 %274
        %276 = vrot.lane.b32.xlu0 %v145, 6
        %v277 = vpop.permute.xlu0 %276
        %vm286 = vcmask 162968
        %287 = vst.msk [vmem:[#allocation2] sm:$0xff] %vm286, %v263
        %288 = vst.msk [vmem:[#allocation2 + $0x8] sm:$0xff] %vm286, %v265
        %289 = vst.msk [vmem:[#allocation2 + $0x10] sm:$0xff] %vm286, %v267
        %290 = vst.msk [vmem:[#allocation2 + $0x18] sm:$0xff] %vm286, %v269
        %291 = vst.msk [vmem:[#allocation2 + $0x20] sm:$0xff] %vm286, %v271
        %292 = vst.msk [vmem:[#allocation2 + $0x28] sm:$0xff] %vm286, %v273
        %293 = vst.msk [vmem:[#allocation2 + $0x30] sm:$0xff] %vm286, %v275
        %294 = vst.msk [vmem:[#allocation2 + $0x38] sm:$0xff] %vm286, %v277
        %v295 = vld [vmem:[#allocation2] sm:$0xff]
        %v296 = vld [vmem:[#allocation2 + $0x8] sm:$0xff]
        %v297 = vld [vmem:[#allocation2 + $0x10] sm:$0xff]
        %v298 = vld [vmem:[#allocation2 + $0x18] sm:$0xff]
        %v299 = vld [vmem:[#allocation2 + $0x20] sm:$0xff]
        %v300 = vld [vmem:[#allocation2 + $0x28] sm:$0xff]
        %v301 = vld [vmem:[#allocation2 + $0x30] sm:$0xff]
        %v302 = vld [vmem:[#allocation2 + $0x38] sm:$0xff]
        %v303 = vmul.f32 %v295, 0.120078385
        %v304 = vmul.f32 %v296, 0.120078385
        %v305 = vmul.f32 %v297, 0.120078385
        %v306 = vmul.f32 %v298, 0.120078385
        %v307 = vmul.f32 %v299, 0.120078385
        %v308 = vmul.f32 %v300, 0.120078385
        %v309 = vmul.f32 %v301, 0.120078385
        %v310 = vmul.f32 %v302, 0.120078385
        %v311 = vmul.f32 %v295, 0.23388076
        %v312 = vmul.f32 %v296, 0.23388076
        %v313 = vmul.f32 %v297, 0.23388076
        %v314 = vmul.f32 %v298, 0.23388076
        %v315 = vmul.f32 %v299, 0.23388076
        %v316 = vmul.f32 %v300, 0.23388076
        %v317 = vmul.f32 %v301, 0.23388076
        %v318 = vmul.f32 %v302, 0.23388076
        %327 = vrot.lane.b32.xlu0 %v311, 127
        %v328 = vpop.permute.xlu0 %327
        %329 = vrot.lane.b32.xlu0 %v312, 127
        %v330 = vpop.permute.xlu0 %329
        %331 = vrot.lane.b32.xlu0 %v313, 127
        %v332 = vpop.permute.xlu0 %331
        %333 = vrot.lane.b32.xlu0 %v314, 127
        %v334 = vpop.permute.xlu0 %333
        %335 = vrot.lane.b32.xlu0 %v315, 127
        %v336 = vpop.permute.xlu0 %335
        %337 = vrot.lane.b32.xlu0 %v316, 127
        %v338 = vpop.permute.xlu0 %337
        %339 = vrot.lane.b32.xlu0 %v317, 127
        %v340 = vpop.permute.xlu0 %339
        %341 = vrot.lane.b32.xlu0 %v318, 127
        %v342 = vpop.permute.xlu0 %341
        %v351 = vadd.f32 %v303, %v328
        %v352 = vadd.f32 %v304, %v330
        %v353 = vadd.f32 %v305, %v332
        %v354 = vadd.f32 %v306, %v334
        %v355 = vadd.f32 %v307, %v336
        %v356 = vadd.f32 %v308, %v338
        %v357 = vadd.f32 %v309, %v340
        %v358 = vadd.f32 %v310, %v342
        %v359 = vmul.f32 %v295, 0.2920817
        %v360 = vmul.f32 %v296, 0.2920817
        %v361 = vmul.f32 %v297, 0.2920817
        %v362 = vmul.f32 %v298, 0.2920817
        %v363 = vmul.f32 %v299, 0.2920817
        %v364 = vmul.f32 %v300, 0.2920817
        %v365 = vmul.f32 %v301, 0.2920817
        %v366 = vmul.f32 %v302, 0.2920817
        %375 = vrot.lane.b32.xlu0 %v359, 126
        %v376 = vpop.permute.xlu0 %375
        %377 = vrot.lane.b32.xlu0 %v360, 126
        %v378 = vpop.permute.xlu0 %377
        %379 = vrot.lane.b32.xlu0 %v361, 126
        %v380 = vpop.permute.xlu0 %379
        %381 = vrot.lane.b32.xlu0 %v362, 126
        %v382 = vpop.permute.xlu0 %381
        %383 = vrot.lane.b32.xlu0 %v363, 126
        %v384 = vpop.permute.xlu0 %383
        %385 = vrot.lane.b32.xlu0 %v364, 126
        %v386 = vpop.permute.xlu0 %385
        %387 = vrot.lane.b32.xlu0 %v365, 126
        %v388 = vpop.permute.xlu0 %387
        %389 = vrot.lane.b32.xlu0 %v366, 126
        %v390 = vpop.permute.xlu0 %389
        %v399 = vadd.f32 %v351, %v376
        %v400 = vadd.f32 %v352, %v378
        %v401 = vadd.f32 %v353, %v380
        %v402 = vadd.f32 %v354, %v382
        %v403 = vadd.f32 %v355, %v384
        %v404 = vadd.f32 %v356, %v386
        %v405 = vadd.f32 %v357, %v388
        %v406 = vadd.f32 %v358, %v390
        %407 = vrot.lane.b32.xlu0 %v311, 125
        %v408 = vpop.permute.xlu0 %407
        %409 = vrot.lane.b32.xlu0 %v312, 125
        %v410 = vpop.permute.xlu0 %409
        %411 = vrot.lane.b32.xlu0 %v313, 125
        %v412 = vpop.permute.xlu0 %411
        %413 = vrot.lane.b32.xlu0 %v314, 125
        %v414 = vpop.permute.xlu0 %413
        %415 = vrot.lane.b32.xlu0 %v315, 125
        %v416 = vpop.permute.xlu0 %415
        %417 = vrot.lane.b32.xlu0 %v316, 125
        %v418 = vpop.permute.xlu0 %417
        %419 = vrot.lane.b32.xlu0 %v317, 125
        %v420 = vpop.permute.xlu0 %419
        %421 = vrot.lane.b32.xlu0 %v318, 125
        %v422 = vpop.permute.xlu0 %421
        %v431 = vadd.f32 %v399, %v408
        %v432 = vadd.f32 %v400, %v410
        %v433 = vadd.f32 %v401, %v412
        %v434 = vadd.f32 %v402, %v414
        %v435 = vadd.f32 %v403, %v416
        %v436 = vadd.f32 %v404, %v418
        %v437 = vadd.f32 %v405, %v420
        %v438 = vadd.f32 %v406, %v422
        %447 = vrot.lane.b32.xlu0 %v303, 124
        %v448 = vpop.permute.xlu0 %447
        %449 = vrot.lane.b32.xlu0 %v304, 124
        %v450 = vpop.permute.xlu0 %449
        %451 = vrot.lane.b32.xlu0 %v305, 124
        %v452 = vpop.permute.xlu0 %451
        %453 = vrot.lane.b32.xlu0 %v306, 124
        %v454 = vpop.permute.xlu0 %453
        %455 = vrot.lane.b32.xlu0 %v307, 124
        %v456 = vpop.permute.xlu0 %455
        %457 = vrot.lane.b32.xlu0 %v308, 124
        %v458 = vpop.permute.xlu0 %457
        %459 = vrot.lane.b32.xlu0 %v309, 124
        %v460 = vpop.permute.xlu0 %459
        %461 = vrot.lane.b32.xlu0 %v310, 124
        %v462 = vpop.permute.xlu0 %461
        %v471 = vadd.f32 %v431, %v448
        %v472 = vadd.f32 %v432, %v450
        %v473 = vadd.f32 %v433, %v452
        %v474 = vadd.f32 %v434, %v454
        %v475 = vadd.f32 %v435, %v456
        %v476 = vadd.f32 %v436, %v458
        %v477 = vadd.f32 %v437, %v460
        %v478 = vadd.f32 %v438, %v462
        %vm479 = vcmask 130048
        %480 = vst.msk [vmem:[#allocation3 + $0x2] sm:$0xff] %vm479, %v471
        %481 = vst.msk [vmem:[#allocation3 + $0xa] sm:$0xff] %vm479, %v472
        %482 = vst.msk [vmem:[#allocation3 + $0x1a] sm:$0xff] %vm479, %v473
        %483 = vst.msk [vmem:[#allocation3 + $0x22] sm:$0xff] %vm479, %v474
        %484 = vst.msk [vmem:[#allocation3 + $0x32] sm:$0xff] %vm479, %v475
        %485 = vst.msk [vmem:[#allocation3 + $0x3a] sm:$0xff] %vm479, %v476
        %486 = vst.msk [vmem:[#allocation3 + $0x4a] sm:$0xff] %vm479, %v477
        %487 = vst.msk [vmem:[#allocation3 + $0x52] sm:$0xff] %vm479, %v478
        %vm488 = vcmask 124930
        %489 = vst.msk [vmem:[#allocation3 - $0x2] sm:$0x4] %vm488, %v471
        %490 = vst.msk [vmem:[#allocation3 + $0x16] sm:$0x4] %vm488, %v473
        %491 = vst.msk [vmem:[#allocation3 + $0x2e] sm:$0x4] %vm488, %v475
        %492 = vst.msk [vmem:[#allocation3 + $0x46] sm:$0x4] %vm488, %v477
        %vm493 = vcmask 129030
        %494 = vst.msk [vmem:[#allocation3 + $0xc] sm:$0x40] %vm493, %v472
        %495 = vst.msk [vmem:[#allocation3 + $0x24] sm:$0x40] %vm493, %v474
        %496 = vst.msk [vmem:[#allocation3 + $0x3c] sm:$0x40] %vm493, %v476
        %497 = vst.msk [vmem:[#allocation3 + $0x54] sm:$0x40] %vm493, %v478
        %vm498 = vcmask 123905
        %499 = vst.msk [vmem:[#allocation3] sm:$0x2] %vm498, %v471
        %500 = vst.msk [vmem:[#allocation3 + $0x18] sm:$0x2] %vm498, %v473
        %501 = vst.msk [vmem:[#allocation3 + $0x30] sm:$0x2] %vm498, %v475
        %502 = vst.msk [vmem:[#allocation3 + $0x48] sm:$0x2] %vm498, %v477
        %vm503 = vcmask 128005
        %504 = vst.msk [vmem:[#allocation3 + $0xe] sm:$0x20] %vm503, %v472
        %505 = vst.msk [vmem:[#allocation3 + $0x26] sm:$0x20] %vm503, %v474
        %506 = vst.msk [vmem:[#allocation3 + $0x3e] sm:$0x20] %vm503, %v476
        %507 = vst.msk [vmem:[#allocation3 + $0x56] sm:$0x20] %vm503, %v478
        %v508 = vld [vmem:[#allocation3] sm:$0xff]
        %v509 = vld [vmem:[#allocation3 + $0x8] sm:$0xff]
        %v510 = vld [vmem:[#allocation3 + $0x10] sm:$0xf]
        %v511 = vld [vmem:[#allocation3 + $0x18] sm:$0xff]
        %v512 = vld [vmem:[#allocation3 + $0x20] sm:$0xff]
        %v513 = vld [vmem:[#allocation3 + $0x28] sm:$0xf]
        %v514 = vld [vmem:[#allocation3 + $0x30] sm:$0xff]
        %v515 = vld [vmem:[#allocation3 + $0x38] sm:$0xff]
        %v516 = vld [vmem:[#allocation3 + $0x40] sm:$0xf]
        %v517 = vld [vmem:[#allocation3 + $0x48] sm:$0xff]
        %v518 = vld [vmem:[#allocation3 + $0x50] sm:$0xff]
        %v519 = vld [vmem:[#allocation3 + $0x58] sm:$0xf]
        %v520 = vmul.f32 %v508, 0.120078385
        %v521 = vmul.f32 %v509, 0.120078385
        %v522 = vmul.f32 %v511, 0.120078385
        %v523 = vmul.f32 %v512, 0.120078385
        %v524 = vmul.f32 %v514, 0.120078385
        %v525 = vmul.f32 %v515, 0.120078385
        %v526 = vmul.f32 %v517, 0.120078385
        %v527 = vmul.f32 %v518, 0.120078385
        %v528 = vmul.f32 %v508, 0.23388076
        %v529 = vmul.f32 %v509, 0.23388076
        %v530 = vmul.f32 %v510, 0.23388076
        %v531 = vmul.f32 %v511, 0.23388076
        %v532 = vmul.f32 %v512, 0.23388076
        %v533 = vmul.f32 %v513, 0.23388076
        %v534 = vmul.f32 %v514, 0.23388076
        %v535 = vmul.f32 %v515, 0.23388076
        %v536 = vmul.f32 %v516, 0.23388076
        %v537 = vmul.f32 %v517, 0.23388076
        %v538 = vmul.f32 %v518, 0.23388076
        %v539 = vmul.f32 %v519, 0.23388076
        %vm552 = vcmask 1046528
        %v553 = vrot.slane %v528, 1
        %v554 = vrot.slane %v529, 1
        %v555 = vsel %vm552, %v553, %v554
        %v556 = vrot.slane %v530, 1
        %v557 = vsel %vm552, %v554, %v556
        %v558 = vrot.slane %v531, 1
        %v559 = vrot.slane %v532, 1
        %v560 = vsel %vm552, %v558, %v559
        %v561 = vrot.slane %v533, 1
        %v562 = vsel %vm552, %v559, %v561
        %v563 = vrot.slane %v534, 1
        %v564 = vrot.slane %v535, 1
        %v565 = vsel %vm552, %v563, %v564
        %v566 = vrot.slane %v536, 1
        %v567 = vsel %vm552, %v564, %v566
        %v568 = vrot.slane %v537, 1
        %v569 = vrot.slane %v538, 1
        %v570 = vsel %vm552, %v568, %v569
        %v571 = vrot.slane %v539, 1
        %v572 = vsel %vm552, %v569, %v571
        %v581 = vadd.f32 %v520, %v555
        %v582 = vadd.f32 %v521, %v557
        %v583 = vadd.f32 %v522, %v560
        %v584 = vadd.f32 %v523, %v562
        %v585 = vadd.f32 %v524, %v565
        %v586 = vadd.f32 %v525, %v567
        %v587 = vadd.f32 %v526, %v570
        %v588 = vadd.f32 %v527, %v572
        %v589 = vmul.f32 %v508, 0.2920817
        %v590 = vmul.f32 %v509, 0.2920817
        %v591 = vmul.f32 %v510, 0.2920817
        %v592 = vmul.f32 %v511, 0.2920817
        %v593 = vmul.f32 %v512, 0.2920817
        %v594 = vmul.f32 %v513, 0.2920817
        %v595 = vmul.f32 %v514, 0.2920817
        %v596 = vmul.f32 %v515, 0.2920817
        %v597 = vmul.f32 %v516, 0.2920817
        %v598 = vmul.f32 %v517, 0.2920817
        %v599 = vmul.f32 %v518, 0.2920817
        %v600 = vmul.f32 %v519, 0.2920817
        %vm613 = vcmask 1045504
        %v614 = vrot.slane %v589, 2
        %v615 = vrot.slane %v590, 2
        %v616 = vsel %vm613, %v614, %v615
        %v617 = vrot.slane %v591, 2
        %v618 = vsel %vm613, %v615, %v617
        %v619 = vrot.slane %v592, 2
        %v620 = vrot.slane %v593, 2
        %v621 = vsel %vm613, %v619, %v620
        %v622 = vrot.slane %v594, 2
        %v623 = vsel %vm613, %v620, %v622
        %v624 = vrot.slane %v595, 2
        %v625 = vrot.slane %v596, 2
        %v626 = vsel %vm613, %v624, %v625
        %v627 = vrot.slane %v597, 2
        %v628 = vsel %vm613, %v625, %v627
        %v629 = vrot.slane %v598, 2
        %v630 = vrot.slane %v599, 2
        %v631 = vsel %vm613, %v629, %v630
        %v632 = vrot.slane %v600, 2
        %v633 = vsel %vm613, %v630, %v632
        %v642 = vadd.f32 %v581, %v616
        %v643 = vadd.f32 %v582, %v618
        %v644 = vadd.f32 %v583, %v621
        %v645 = vadd.f32 %v584, %v623
        %v646 = vadd.f32 %v585, %v626
        %v647 = vadd.f32 %v586, %v628
        %v648 = vadd.f32 %v587, %v631
        %v649 = vadd.f32 %v588, %v633
        %vm650 = vcmask 1044480
        %v651 = vrot.slane %v528, 3
        %v652 = vrot.slane %v529, 3
        %v653 = vsel %vm650, %v651, %v652
        %v654 = vrot.slane %v530, 3
        %v655 = vsel %vm650, %v652, %v654
        %v656 = vrot.slane %v531, 3
        %v657 = vrot.slane %v532, 3
        %v658 = vsel %vm650, %v656, %v657
        %v659 = vrot.slane %v533, 3
        %v660 = vsel %vm650, %v657, %v659
        %v661 = vrot.slane %v534, 3
        %v662 = vrot.slane %v535, 3
        %v663 = vsel %vm650, %v661, %v662
        %v664 = vrot.slane %v536, 3
        %v665 = vsel %vm650, %v662, %v664
        %v666 = vrot.slane %v537, 3
        %v667 = vrot.slane %v538, 3
        %v668 = vsel %vm650, %v666, %v667
        %v669 = vrot.slane %v539, 3
        %v670 = vsel %vm650, %v667, %v669
        %v679 = vadd.f32 %v642, %v653
        %v680 = vadd.f32 %v643, %v655
        %v681 = vadd.f32 %v644, %v658
        %v682 = vadd.f32 %v645, %v660
        %v683 = vadd.f32 %v646, %v663
        %v684 = vadd.f32 %v647, %v665
        %v685 = vadd.f32 %v648, %v668
        %v686 = vadd.f32 %v649, %v670
        %v687 = vmul.f32 %v510, 0.120078385
        %v688 = vmul.f32 %v513, 0.120078385
        %v689 = vmul.f32 %v516, 0.120078385
        %v690 = vmul.f32 %v519, 0.120078385
        %vm703 = vcmask 1043456
        %v704 = vrot.slane %v520, 4
        %v705 = vrot.slane %v521, 4
        %v706 = vsel %vm703, %v704, %v705
        %v707 = vrot.slane %v687, 4
        %v708 = vsel %vm703, %v705, %v707
        %v709 = vrot.slane %v522, 4
        %v710 = vrot.slane %v523, 4
        %v711 = vsel %vm703, %v709, %v710
        %v712 = vrot.slane %v688, 4
        %v713 = vsel %vm703, %v710, %v712
        %v714 = vrot.slane %v524, 4
        %v715 = vrot.slane %v525, 4
        %v716 = vsel %vm703, %v714, %v715
        %v717 = vrot.slane %v689, 4
        %v718 = vsel %vm703, %v715, %v717
        %v719 = vrot.slane %v526, 4
        %v720 = vrot.slane %v527, 4
        %v721 = vsel %vm703, %v719, %v720
        %v722 = vrot.slane %v690, 4
        %v723 = vsel %vm703, %v720, %v722
        %v732 = vadd.f32 %v679, %v706
        %v733 = vadd.f32 %v680, %v708
        %v734 = vadd.f32 %v681, %v711
        %v735 = vadd.f32 %v682, %v713
        %v736 = vadd.f32 %v683, %v716
        %v737 = vadd.f32 %v684, %v718
        %v738 = vadd.f32 %v685, %v721
        %v739 = vadd.f32 %v686, %v723
        %740 = vst.msk [vmem:[%s135] sm:$0xff] %vm479, %v732
        %741 = vst.msk [vmem:[%s135 + $0x8] sm:$0xff] %vm479, %v733
        %742 = vst.msk [vmem:[%s135 + $0x10] sm:$0xff] %vm479, %v734
        %743 = vst.msk [vmem:[%s135 + $0x18] sm:$0xff] %vm479, %v735
        %744 = vst.msk [vmem:[%s135 + $0x20] sm:$0xff] %vm479, %v736
        %745 = vst.msk [vmem:[%s135 + $0x28] sm:$0xff] %vm479, %v737
        %746 = vst.msk [vmem:[%s135 + $0x30] sm:$0xff] %vm479, %v738
        %747 = vst.msk [vmem:[%s135 + $0x38] sm:$0xff] %vm479, %v739
        %s748 = sand.u32 %s52, 1
        %s749 = scalar_lea.sflag [#allocation6], %s748
        %s750 = sand.u32 %s52, 1
        %s751 = smul.addr %s750, 64
        %s752 = scalar_lea.vmem [#allocation7], %s751
        // Predicated region
        $region29: #{tpu_custom_call.1} parent=23 // pred_check
          %p753 = pneg %p62
        $region30: #{tpu_custom_call.1} parent=23 // pred_check_branch
          %755 = sbr.rel (%p753) target = $region32
        $region31: #{tpu_custom_call.1} parent=23 // pred_region
          %s756 = smul.u32 4, %s18
          %s758 = ssub.s32 1024, 1024
          %759 = vsyncadd %s749, %s758
          %s760 = smul.addr %s756, 2
          %s761 = smul.addr %s760, 128
          %s762 = scalar_lea.hbm %s1, %s761
          %s763 = sshll.u32 %s752, 4
          %s764 = int_to_ptr.vmem [resolvable:$true] %s763
          %769 = dma.vmem_to_hbm [thread:$0]  %s764, 1024, %s762, %s749, 128, 128, 8
        $region32: #{tpu_custom_call.1} parent=23 // pred_fallthru
          _
      $region24: #{tpu_custom_call.1} parent=5 // pred_fallthru
        _
      %p770 = scmp.le.s32.totalorder 2, %s13
      // Predicated region
      $region33: #{tpu_custom_call.1} parent=5 // pred_check
        %p771 = pneg %p770
      $region34: #{tpu_custom_call.1} parent=5 // pred_check_branch
        %773 = sbr.rel (%p771) target = $region36
      $region35: #{tpu_custom_call.1} parent=5 // pred_region
        %s774 = ssub.s32 %s13, 2
        // Predicated region
        $region37: #{tpu_custom_call.1} parent=35 // pred_check
          %p775 = pneg %p68
        $region38: #{tpu_custom_call.1} parent=35 // pred_check_branch
          %777 = sbr.rel (%p775) target = $region40
        $region39: #{tpu_custom_call.1} parent=35 // pred_region
          %s778 = sand.u32 %s53, 1
          %s779 = scalar_lea.sflag [#allocation6], %s778
          %s780 = sand.u32 %s53, 1
          %s781 = smul.addr %s780, 64
          %s782 = scalar_lea.vmem [#allocation7], %s781
          %783 = dma.done %s779, 1024
        $region40: #{tpu_custom_call.1} parent=35 // pred_fallthru
          _
      $region36: #{tpu_custom_call.1} parent=5 // pred_fallthru
        _
    $region6: #{tpu_custom_call.1} parent=1 // loop_footer
      %s17 = sadd.s32 1, %s13
    $region7: #{tpu_custom_call.1} parent=1 // loop_footer_branch
      %12 = sbr.rel target = $region3
    $region8: #{tpu_custom_call.1} parent=1 // loop_exit
      _
    %784 = vsyncpa [#allocation5], 1
    %s785 = scalar_lea.sflag [#allocation5], 1
    %786 = vsyncpa %s785, 1
    %787 = vsyncpa [#allocation6], 1
    %s788 = scalar_lea.sflag [#allocation6], 1
    %789 = vsyncpa %s788, 1

</llo_original>
